<compile_context>
chip_gen: v5e
topology: v5e:2x2
jax: 0.10.0
libtpu: 0.0.40
codegen_flags: <defaults>
</compile_context>

<pallas_src>
import math
from functools import partial

import jax
import jax.numpy as jnp
from jax import lax
from jax.experimental import pallas as pl
from jax.experimental.pallas import tpu as pltpu


def _fused_mha_kernel(x_ref, qw_ref, qb_ref, kw_ref, kb_ref, vw_ref, vb_ref,
                      ow_ref, ob_ref, o_ref, *, L, N, H, Dh):
    """x_ref: (N*L, E) batch-major rows.  All weights VMEM-resident.

    Computes out_proj(MultiHeadAttention(x)); single lane-dense (N*L, E) store.
    """
    E = H * Dh
    x2 = x_ref[...]                                                   # (N*L, E)

    # Split in-projection (no packed-qkv lane offsets).  Softmax scale is
    # pre-folded into qw/qb, so q is already scaled by 1/sqrt(Dh).
    q_all = (jnp.dot(x2, qw_ref[...], preferred_element_type=jnp.float32)
             + qb_ref[...])                                           # (N*L, E)
    k_all = (jnp.dot(x2, kw_ref[...], preferred_element_type=jnp.float32)
             + kb_ref[...])
    v_all = (jnp.dot(x2, vw_ref[...], preferred_element_type=jnp.float32)
             + vb_ref[...])

    ctx_rows = []
    for n in range(N):                                                # unrolled
        r = n * L
        head_cols = []
        for h in range(H):                                            # unrolled
            c = h * Dh
            q = q_all[r:r + L, c:c + Dh]                              # (L, Dh)
            k = k_all[r:r + L, c:c + Dh]                              # (L, Dh)
            v = v_all[r:r + L, c:c + Dh]                              # (L, Dh)

            # scores = q @ k^T without an explicit transpose (contract Dh vs Dh).
            s = lax.dot_general(q, k, (((1,), (1,)), ((), ())),
                                preferred_element_type=jnp.float32)   # (L, L)
            m = jnp.max(s, axis=-1, keepdims=True)
            p = jnp.exp(s - m)
            p = p * pl.reciprocal(jnp.sum(p, axis=-1, keepdims=True),
                                  approx=False)                       # exact
            head_cols.append(jnp.dot(p, v,
                                     preferred_element_type=jnp.float32))
        ctx_rows.append(jnp.concatenate(head_cols, axis=1))           # (L, E)
    ctx = jnp.concatenate(ctx_rows, axis=0)                           # (N*L, E)

    # Consolidated out-projection: ONE matmul with K=E, then one lane-dense store
    # (the only HBM writeback of the whole kernel).
    out = (jnp.dot(ctx, ow_ref[...], preferred_element_type=jnp.float32)
           + ob_ref[...])
    o_ref[...] = out.astype(o_ref.dtype)


@partial(jax.jit, static_argnames=("n_heads",))
def attention_forward(x, params, n_heads):
    """x: (L, N, E), matching nn.MultiheadAttention (batch_first=False)."""
    L, N, E = x.shape
    H = n_heads
    Dh = E // H

    # Batch-major rows so each batch element is a contiguous sublane block.
    # TODO(synk): at larger shapes fold this transpose (and the output one) into
    # a BlockSpec index_map instead of separate XLA transpose ops, add a
    # ("parallel", ...) grid axis over N*H for v7x's 2 TensorCores, and re-derive
    # tiling against v7x's 64 MiB VMEM with an explicit vmem_limit_bytes.
    x2 = x.transpose(1, 0, 2).reshape(N * L, E)

    # NOTE: the module's self.q/self.k/self.v Linear layers are dead code in the
    # PyTorch forward (results discarded), so they are intentionally not executed.

    cost = pl.CostEstimate(
        flops=2 * N * L * E * E * 4              # 3 in-proj + 1 out-proj matmuls
        + 2 * (2 * N * H * L * L * Dh),          # scores + p@v
        transcendentals=N * H * L * L,           # exp
        bytes_accessed=4 * (2 * N * L * E + 4 * E * E + 4 * E),
    )
    vmem = pl.BlockSpec(memory_space=pltpu.MemorySpace.VMEM)

    out2 = pl.pallas_call(
        partial(_fused_mha_kernel, L=L, N=N, H=H, Dh=Dh),
        out_shape=jax.ShapeDtypeStruct((N * L, E), jnp.float32),
        in_specs=[vmem] * 9,
        out_specs=vmem,
        cost_estimate=cost,
    )(x2,
      params["q_w"], params["q_b"],
      params["k_w"], params["k_b"],
      params["v_w"], params["v_b"],
      params["out_w"], params["out_b"])

    return out2.reshape(N, L, E).transpose(1, 0, 2)                   # (L, N, E)


def init_params(key, dim):
    """Deterministic synthetic parameters with nn.MultiheadAttention shapes."""
    ks = jax.random.split(key, 4)
    s = 1.0 / math.sqrt(dim)

    def w(k, shape):
        return jax.random.uniform(k, shape, jnp.float32, -s, s)

    return {
        "in_proj_weight": w(ks[0], (3 * dim, dim)),   # PyTorch layout (3E, E)
        "in_proj_bias": w(ks[1], (3 * dim,)),
        "out_proj_weight": w(ks[2], (dim, dim)),      # PyTorch layout (E, E)
        "out_proj_bias": w(ks[3], (dim,)),
    }


def prepare_params(raw, dim, n_heads):
    """One-time transform: split packed in_proj into q/k/v, transpose to
    (in, out) layout for x @ W, and fold the 1/sqrt(Dh) softmax scale into the
    q weights/bias (so the kernel never multiplies by `scale`)."""
    scale = 1.0 / math.sqrt(dim // n_heads)
    w_q, w_k, w_v = jnp.split(raw["in_proj_weight"], 3, axis=0)       # (E, E) ea
    b_q, b_k, b_v = jnp.split(raw["in_proj_bias"], 3, axis=0)
    return {
        "q_w": (w_q * scale).T,
        "q_b": (b_q * scale).reshape(1, dim),
        "k_w": w_k.T,
        "k_b": b_k.reshape(1, dim),
        "v_w": w_v.T,
        "v_b": b_v.reshape(1, dim),
        "out_w": raw["out_proj_weight"].T,
        "out_b": raw["out_proj_bias"].reshape(1, dim),
    }


def _reference_forward(x, raw, n_heads):
    """Pure-JAX reference matching nn.MultiheadAttention semantics, computed
    from the RAW (unsplit, unscaled) parameters."""
    L, N, E = x.shape
    H = n_heads
    Dh = E // H
    x2 = x.reshape(L * N, E)
    qkv = x2 @ raw["in_proj_weight"].T + raw["in_proj_bias"]
    q, k, v = jnp.split(qkv, 3, axis=-1)

    def heads(t):  # (L*N, E) -> (N*H, L, Dh)
        return t.reshape(L, N * H, Dh).transpose(1, 0, 2)

    q, k, v = heads(q), heads(k), heads(v)
    s = jnp.einsum("bqd,bkd->bqk", q, k) / math.sqrt(Dh)
    p = jax.nn.softmax(s, axis=-1)
    o = jnp.einsum("bqk,bkd->bqd", p, v)
    o = o.transpose(1, 0, 2).reshape(L * N, E)
    return (o @ raw["out_proj_weight"].T + raw["out_proj_bias"]).reshape(L, N, E)


if __name__ == "__main__":
    dim, n_heads = 32, 4
    seq, batch = 8, 2

    key = jax.random.PRNGKey(0)
    k_x, k_p = jax.random.split(key)
    x = jax.random.normal(k_x, (seq, batch, dim), jnp.float32)        # (L, N, E)

    raw = init_params(k_p, dim)
    params = prepare_params(raw, dim, n_heads)                        # one-time

    out = attention_forward(x, params, n_heads)
    out = jax.block_until_ready(out)
    assert out.shape == (seq, batch, dim)

    ref = _reference_forward(x, raw, n_heads)
    max_err = float(jnp.max(jnp.abs(out - ref)))
    assert jnp.allclose(out, ref, atol=1e-2, rtol=1e-2), max_err

    print("KERNEL_OK")
</pallas_src>

<mosaic_0001>
module attributes {stable_mosaic.version = 11 : i64} {
  func.func @_fused_mha_kernel(%arg0: memref<16x32xf32, #tpu.memory_space<vmem>>, %arg1: memref<32x32xf32, #tpu.memory_space<vmem>>, %arg2: memref<1x32xf32, #tpu.memory_space<vmem>>, %arg3: memref<32x32xf32, #tpu.memory_space<vmem>>, %arg4: memref<1x32xf32, #tpu.memory_space<vmem>>, %arg5: memref<32x32xf32, #tpu.memory_space<vmem>>, %arg6: memref<1x32xf32, #tpu.memory_space<vmem>>, %arg7: memref<32x32xf32, #tpu.memory_space<vmem>>, %arg8: memref<1x32xf32, #tpu.memory_space<vmem>>, %arg9: memref<16x32xf32, #tpu.memory_space<vmem>>) attributes {dimension_semantics = [], scalar_prefetch = 0 : i64, scratch_operands = 0 : i64, tpu.core_type = #tpu.core_type<tc>} {
    %c0 = arith.constant 0 : index
    %c0_0 = arith.constant 0 : index
    %0 = vector.load %arg0[%c0, %c0_0] : memref<16x32xf32, #tpu.memory_space<vmem>>, vector<16x32xf32>
    %c0_1 = arith.constant 0 : index
    %c0_2 = arith.constant 0 : index
    %1 = vector.load %arg1[%c0_1, %c0_2] : memref<32x32xf32, #tpu.memory_space<vmem>>, vector<32x32xf32>
    %cst = arith.constant dense<0.000000e+00> : vector<16x32xf32>
    %2 = tpu.matmul %0, %1, %cst {dimension_numbers = #tpu.dot_dimension_numbers<[1], [0], [0], [1], [0, 0, 1, 1], [], []>} : vector<16x32xf32>, vector<32x32xf32>, vector<16x32xf32> -> vector<16x32xf32>
    %c0_3 = arith.constant 0 : index
    %c0_4 = arith.constant 0 : index
    %3 = vector.load %arg2[%c0_3, %c0_4] : memref<1x32xf32, #tpu.memory_space<vmem>>, vector<1x32xf32>
    %4 = vector.broadcast %3 : vector<1x32xf32> to vector<16x32xf32>
    %5 = arith.addf %2, %4 : vector<16x32xf32>
    %c0_5 = arith.constant 0 : index
    %c0_6 = arith.constant 0 : index
    %6 = vector.load %arg3[%c0_5, %c0_6] : memref<32x32xf32, #tpu.memory_space<vmem>>, vector<32x32xf32>
    %cst_7 = arith.constant dense<0.000000e+00> : vector<16x32xf32>
    %7 = tpu.matmul %0, %6, %cst_7 {dimension_numbers = #tpu.dot_dimension_numbers<[1], [0], [0], [1], [0, 0, 1, 1], [], []>} : vector<16x32xf32>, vector<32x32xf32>, vector<16x32xf32> -> vector<16x32xf32>
    %c0_8 = arith.constant 0 : index
    %c0_9 = arith.constant 0 : index
    %8 = vector.load %arg4[%c0_8, %c0_9] : memref<1x32xf32, #tpu.memory_space<vmem>>, vector<1x32xf32>
    %9 = vector.broadcast %8 : vector<1x32xf32> to vector<16x32xf32>
    %10 = arith.addf %7, %9 : vector<16x32xf32>
    %c0_10 = arith.constant 0 : index
    %c0_11 = arith.constant 0 : index
    %11 = vector.load %arg5[%c0_10, %c0_11] : memref<32x32xf32, #tpu.memory_space<vmem>>, vector<32x32xf32>
    %cst_12 = arith.constant dense<0.000000e+00> : vector<16x32xf32>
    %12 = tpu.matmul %0, %11, %cst_12 {dimension_numbers = #tpu.dot_dimension_numbers<[1], [0], [0], [1], [0, 0, 1, 1], [], []>} : vector<16x32xf32>, vector<32x32xf32>, vector<16x32xf32> -> vector<16x32xf32>
    %c0_13 = arith.constant 0 : index
    %c0_14 = arith.constant 0 : index
    %13 = vector.load %arg6[%c0_13, %c0_14] : memref<1x32xf32, #tpu.memory_space<vmem>>, vector<1x32xf32>
    %14 = vector.broadcast %13 : vector<1x32xf32> to vector<16x32xf32>
    %15 = arith.addf %12, %14 : vector<16x32xf32>
    %16 = vector.extract_strided_slice %5 {offsets = [0, 0], sizes = [8, 8], strides = [1, 1]} : vector<16x32xf32> to vector<8x8xf32>
    %17 = vector.extract_strided_slice %10 {offsets = [0, 0], sizes = [8, 8], strides = [1, 1]} : vector<16x32xf32> to vector<8x8xf32>
    %18 = vector.extract_strided_slice %15 {offsets = [0, 0], sizes = [8, 8], strides = [1, 1]} : vector<16x32xf32> to vector<8x8xf32>
    %cst_15 = arith.constant dense<0.000000e+00> : vector<8x8xf32>
    %19 = tpu.matmul %16, %17, %cst_15 {dimension_numbers = #tpu.dot_dimension_numbers<[1], [1], [0], [0], [0, 0, 1, 0], [], []>} : vector<8x8xf32>, vector<8x8xf32>, vector<8x8xf32> -> vector<8x8xf32>
    %cst_16 = arith.constant dense<0xFF800000> : vector<8xf32>
    %20 = vector.multi_reduction <maximumf>, %19, %cst_16 [1] : vector<8x8xf32> to vector<8xf32>
    %21 = vector.shape_cast %20 : vector<8xf32> to vector<8x1xf32>
    %22 = vector.broadcast %21 : vector<8x1xf32> to vector<8x8xf32>
    %23 = arith.subf %19, %22 : vector<8x8xf32>
    %24 = math.exp %23 : vector<8x8xf32>
    %cst_17 = arith.constant dense<0.000000e+00> : vector<8xf32>
    %25 = vector.multi_reduction <add>, %24, %cst_17 [1] : vector<8x8xf32> to vector<8xf32>
    %26 = vector.shape_cast %25 : vector<8xf32> to vector<8x1xf32>
    %27 = tpu.reciprocal %26 : vector<8x1xf32> -> vector<8x1xf32>
    %28 = vector.broadcast %27 : vector<8x1xf32> to vector<8x8xf32>
    %29 = arith.mulf %24, %28 : vector<8x8xf32>
    %cst_18 = arith.constant dense<0.000000e+00> : vector<8x8xf32>
    %30 = tpu.matmul %29, %18, %cst_18 {dimension_numbers = #tpu.dot_dimension_numbers<[1], [0], [0], [1], [0, 0, 1, 1], [], []>} : vector<8x8xf32>, vector<8x8xf32>, vector<8x8xf32> -> vector<8x8xf32>
    %31 = vector.extract_strided_slice %5 {offsets = [0, 8], sizes = [8, 8], strides = [1, 1]} : vector<16x32xf32> to vector<8x8xf32>
    %32 = vector.extract_strided_slice %10 {offsets = [0, 8], sizes = [8, 8], strides = [1, 1]} : vector<16x32xf32> to vector<8x8xf32>
    %33 = vector.extract_strided_slice %15 {offsets = [0, 8], sizes = [8, 8], strides = [1, 1]} : vector<16x32xf32> to vector<8x8xf32>
    %cst_19 = arith.constant dense<0.000000e+00> : vector<8x8xf32>
    %34 = tpu.matmul %31, %32, %cst_19 {dimension_numbers = #tpu.dot_dimension_numbers<[1], [1], [0], [0], [0, 0, 1, 0], [], []>} : vector<8x8xf32>, vector<8x8xf32>, vector<8x8xf32> -> vector<8x8xf32>
    %cst_20 = arith.constant dense<0xFF800000> : vector<8xf32>
    %35 = vector.multi_reduction <maximumf>, %34, %cst_20 [1] : vector<8x8xf32> to vector<8xf32>
    %36 = vector.shape_cast %35 : vector<8xf32> to vector<8x1xf32>
    %37 = vector.broadcast %36 : vector<8x1xf32> to vector<8x8xf32>
    %38 = arith.subf %34, %37 : vector<8x8xf32>
    %39 = math.exp %38 : vector<8x8xf32>
    %cst_21 = arith.constant dense<0.000000e+00> : vector<8xf32>
    %40 = vector.multi_reduction <add>, %39, %cst_21 [1] : vector<8x8xf32> to vector<8xf32>
    %41 = vector.shape_cast %40 : vector<8xf32> to vector<8x1xf32>
    %42 = tpu.reciprocal %41 : vector<8x1xf32> -> vector<8x1xf32>
    %43 = vector.broadcast %42 : vector<8x1xf32> to vector<8x8xf32>
    %44 = arith.mulf %39, %43 : vector<8x8xf32>
    %cst_22 = arith.constant dense<0.000000e+00> : vector<8x8xf32>
    %45 = tpu.matmul %44, %33, %cst_22 {dimension_numbers = #tpu.dot_dimension_numbers<[1], [0], [0], [1], [0, 0, 1, 1], [], []>} : vector<8x8xf32>, vector<8x8xf32>, vector<8x8xf32> -> vector<8x8xf32>
    %46 = vector.extract_strided_slice %5 {offsets = [0, 16], sizes = [8, 8], strides = [1, 1]} : vector<16x32xf32> to vector<8x8xf32>
    %47 = vector.extract_strided_slice %10 {offsets = [0, 16], sizes = [8, 8], strides = [1, 1]} : vector<16x32xf32> to vector<8x8xf32>
    %48 = vector.extract_strided_slice %15 {offsets = [0, 16], sizes = [8, 8], strides = [1, 1]} : vector<16x32xf32> to vector<8x8xf32>
    %cst_23 = arith.constant dense<0.000000e+00> : vector<8x8xf32>
    %49 = tpu.matmul %46, %47, %cst_23 {dimension_numbers = #tpu.dot_dimension_numbers<[1], [1], [0], [0], [0, 0, 1, 0], [], []>} : vector<8x8xf32>, vector<8x8xf32>, vector<8x8xf32> -> vector<8x8xf32>
    %cst_24 = arith.constant dense<0xFF800000> : vector<8xf32>
    %50 = vector.multi_reduction <maximumf>, %49, %cst_24 [1] : vector<8x8xf32> to vector<8xf32>
    %51 = vector.shape_cast %50 : vector<8xf32> to vector<8x1xf32>
    %52 = vector.broadcast %51 : vector<8x1xf32> to vector<8x8xf32>
    %53 = arith.subf %49, %52 : vector<8x8xf32>
    %54 = math.exp %53 : vector<8x8xf32>
    %cst_25 = arith.constant dense<0.000000e+00> : vector<8xf32>
    %55 = vector.multi_reduction <add>, %54, %cst_25 [1] : vector<8x8xf32> to vector<8xf32>
    %56 = vector.shape_cast %55 : vector<8xf32> to vector<8x1xf32>
    %57 = tpu.reciprocal %56 : vector<8x1xf32> -> vector<8x1xf32>
    %58 = vector.broadcast %57 : vector<8x1xf32> to vector<8x8xf32>
    %59 = arith.mulf %54, %58 : vector<8x8xf32>
    %cst_26 = arith.constant dense<0.000000e+00> : vector<8x8xf32>
    %60 = tpu.matmul %59, %48, %cst_26 {dimension_numbers = #tpu.dot_dimension_numbers<[1], [0], [0], [1], [0, 0, 1, 1], [], []>} : vector<8x8xf32>, vector<8x8xf32>, vector<8x8xf32> -> vector<8x8xf32>
    %61 = vector.extract_strided_slice %5 {offsets = [0, 24], sizes = [8, 8], strides = [1, 1]} : vector<16x32xf32> to vector<8x8xf32>
    %62 = vector.extract_strided_slice %10 {offsets = [0, 24], sizes = [8, 8], strides = [1, 1]} : vector<16x32xf32> to vector<8x8xf32>
    %63 = vector.extract_strided_slice %15 {offsets = [0, 24], sizes = [8, 8], strides = [1, 1]} : vector<16x32xf32> to vector<8x8xf32>
    %cst_27 = arith.constant dense<0.000000e+00> : vector<8x8xf32>
    %64 = tpu.matmul %61, %62, %cst_27 {dimension_numbers = #tpu.dot_dimension_numbers<[1], [1], [0], [0], [0, 0, 1, 0], [], []>} : vector<8x8xf32>, vector<8x8xf32>, vector<8x8xf32> -> vector<8x8xf32>
    %cst_28 = arith.constant dense<0xFF800000> : vector<8xf32>
    %65 = vector.multi_reduction <maximumf>, %64, %cst_28 [1] : vector<8x8xf32> to vector<8xf32>
    %66 = vector.shape_cast %65 : vector<8xf32> to vector<8x1xf32>
    %67 = vector.broadcast %66 : vector<8x1xf32> to vector<8x8xf32>
    %68 = arith.subf %64, %67 : vector<8x8xf32>
    %69 = math.exp %68 : vector<8x8xf32>
    %cst_29 = arith.constant dense<0.000000e+00> : vector<8xf32>
    %70 = vector.multi_reduction <add>, %69, %cst_29 [1] : vector<8x8xf32> to vector<8xf32>
    %71 = vector.shape_cast %70 : vector<8xf32> to vector<8x1xf32>
    %72 = tpu.reciprocal %71 : vector<8x1xf32> -> vector<8x1xf32>
    %73 = vector.broadcast %72 : vector<8x1xf32> to vector<8x8xf32>
    %74 = arith.mulf %69, %73 : vector<8x8xf32>
    %cst_30 = arith.constant dense<0.000000e+00> : vector<8x8xf32>
    %75 = tpu.matmul %74, %63, %cst_30 {dimension_numbers = #tpu.dot_dimension_numbers<[1], [0], [0], [1], [0, 0, 1, 1], [], []>} : vector<8x8xf32>, vector<8x8xf32>, vector<8x8xf32> -> vector<8x8xf32>
    %76 = tpu.concatenate %30, %45, %60, %75 in 1 : vector<8x8xf32>, vector<8x8xf32>, vector<8x8xf32>, vector<8x8xf32> -> vector<8x32xf32>
    %77 = vector.extract_strided_slice %5 {offsets = [8, 0], sizes = [8, 8], strides = [1, 1]} : vector<16x32xf32> to vector<8x8xf32>
    %78 = vector.extract_strided_slice %10 {offsets = [8, 0], sizes = [8, 8], strides = [1, 1]} : vector<16x32xf32> to vector<8x8xf32>
    %79 = vector.extract_strided_slice %15 {offsets = [8, 0], sizes = [8, 8], strides = [1, 1]} : vector<16x32xf32> to vector<8x8xf32>
    %cst_31 = arith.constant dense<0.000000e+00> : vector<8x8xf32>
    %80 = tpu.matmul %77, %78, %cst_31 {dimension_numbers = #tpu.dot_dimension_numbers<[1], [1], [0], [0], [0, 0, 1, 0], [], []>} : vector<8x8xf32>, vector<8x8xf32>, vector<8x8xf32> -> vector<8x8xf32>
    %cst_32 = arith.constant dense<0xFF800000> : vector<8xf32>
    %81 = vector.multi_reduction <maximumf>, %80, %cst_32 [1] : vector<8x8xf32> to vector<8xf32>
    %82 = vector.shape_cast %81 : vector<8xf32> to vector<8x1xf32>
    %83 = vector.broadcast %82 : vector<8x1xf32> to vector<8x8xf32>
    %84 = arith.subf %80, %83 : vector<8x8xf32>
    %85 = math.exp %84 : vector<8x8xf32>
    %cst_33 = arith.constant dense<0.000000e+00> : vector<8xf32>
    %86 = vector.multi_reduction <add>, %85, %cst_33 [1] : vector<8x8xf32> to vector<8xf32>
    %87 = vector.shape_cast %86 : vector<8xf32> to vector<8x1xf32>
    %88 = tpu.reciprocal %87 : vector<8x1xf32> -> vector<8x1xf32>
    %89 = vector.broadcast %88 : vector<8x1xf32> to vector<8x8xf32>
    %90 = arith.mulf %85, %89 : vector<8x8xf32>
    %cst_34 = arith.constant dense<0.000000e+00> : vector<8x8xf32>
    %91 = tpu.matmul %90, %79, %cst_34 {dimension_numbers = #tpu.dot_dimension_numbers<[1], [0], [0], [1], [0, 0, 1, 1], [], []>} : vector<8x8xf32>, vector<8x8xf32>, vector<8x8xf32> -> vector<8x8xf32>
    %92 = vector.extract_strided_slice %5 {offsets = [8, 8], sizes = [8, 8], strides = [1, 1]} : vector<16x32xf32> to vector<8x8xf32>
    %93 = vector.extract_strided_slice %10 {offsets = [8, 8], sizes = [8, 8], strides = [1, 1]} : vector<16x32xf32> to vector<8x8xf32>
    %94 = vector.extract_strided_slice %15 {offsets = [8, 8], sizes = [8, 8], strides = [1, 1]} : vector<16x32xf32> to vector<8x8xf32>
    %cst_35 = arith.constant dense<0.000000e+00> : vector<8x8xf32>
    %95 = tpu.matmul %92, %93, %cst_35 {dimension_numbers = #tpu.dot_dimension_numbers<[1], [1], [0], [0], [0, 0, 1, 0], [], []>} : vector<8x8xf32>, vector<8x8xf32>, vector<8x8xf32> -> vector<8x8xf32>
    %cst_36 = arith.constant dense<0xFF800000> : vector<8xf32>
    %96 = vector.multi_reduction <maximumf>, %95, %cst_36 [1] : vector<8x8xf32> to vector<8xf32>
    %97 = vector.shape_cast %96 : vector<8xf32> to vector<8x1xf32>
    %98 = vector.broadcast %97 : vector<8x1xf32> to vector<8x8xf32>
    %99 = arith.subf %95, %98 : vector<8x8xf32>
    %100 = math.exp %99 : vector<8x8xf32>
    %cst_37 = arith.constant dense<0.000000e+00> : vector<8xf32>
    %101 = vector.multi_reduction <add>, %100, %cst_37 [1] : vector<8x8xf32> to vector<8xf32>
    %102 = vector.shape_cast %101 : vector<8xf32> to vector<8x1xf32>
    %103 = tpu.reciprocal %102 : vector<8x1xf32> -> vector<8x1xf32>
    %104 = vector.broadcast %103 : vector<8x1xf32> to vector<8x8xf32>
    %105 = arith.mulf %100, %104 : vector<8x8xf32>
    %cst_38 = arith.constant dense<0.000000e+00> : vector<8x8xf32>
    %106 = tpu.matmul %105, %94, %cst_38 {dimension_numbers = #tpu.dot_dimension_numbers<[1], [0], [0], [1], [0, 0, 1, 1], [], []>} : vector<8x8xf32>, vector<8x8xf32>, vector<8x8xf32> -> vector<8x8xf32>
    %107 = vector.extract_strided_slice %5 {offsets = [8, 16], sizes = [8, 8], strides = [1, 1]} : vector<16x32xf32> to vector<8x8xf32>
    %108 = vector.extract_strided_slice %10 {offsets = [8, 16], sizes = [8, 8], strides = [1, 1]} : vector<16x32xf32> to vector<8x8xf32>
    %109 = vector.extract_strided_slice %15 {offsets = [8, 16], sizes = [8, 8], strides = [1, 1]} : vector<16x32xf32> to vector<8x8xf32>
    %cst_39 = arith.constant dense<0.000000e+00> : vector<8x8xf32>
    %110 = tpu.matmul %107, %108, %cst_39 {dimension_numbers = #tpu.dot_dimension_numbers<[1], [1], [0], [0], [0, 0, 1, 0], [], []>} : vector<8x8xf32>, vector<8x8xf32>, vector<8x8xf32> -> vector<8x8xf32>
    %cst_40 = arith.constant dense<0xFF800000> : vector<8xf32>
    %111 = vector.multi_reduction <maximumf>, %110, %cst_40 [1] : vector<8x8xf32> to vector<8xf32>
    %112 = vector.shape_cast %111 : vector<8xf32> to vector<8x1xf32>
    %113 = vector.broadcast %112 : vector<8x1xf32> to vector<8x8xf32>
    %114 = arith.subf %110, %113 : vector<8x8xf32>
    %115 = math.exp %114 : vector<8x8xf32>
    %cst_41 = arith.constant dense<0.000000e+00> : vector<8xf32>
    %116 = vector.multi_reduction <add>, %115, %cst_41 [1] : vector<8x8xf32> to vector<8xf32>
    %117 = vector.shape_cast %116 : vector<8xf32> to vector<8x1xf32>
    %118 = tpu.reciprocal %117 : vector<8x1xf32> -> vector<8x1xf32>
    %119 = vector.broadcast %118 : vector<8x1xf32> to vector<8x8xf32>
    %120 = arith.mulf %115, %119 : vector<8x8xf32>
    %cst_42 = arith.constant dense<0.000000e+00> : vector<8x8xf32>
    %121 = tpu.matmul %120, %109, %cst_42 {dimension_numbers = #tpu.dot_dimension_numbers<[1], [0], [0], [1], [0, 0, 1, 1], [], []>} : vector<8x8xf32>, vector<8x8xf32>, vector<8x8xf32> -> vector<8x8xf32>
    %122 = vector.extract_strided_slice %5 {offsets = [8, 24], sizes = [8, 8], strides = [1, 1]} : vector<16x32xf32> to vector<8x8xf32>
    %123 = vector.extract_strided_slice %10 {offsets = [8, 24], sizes = [8, 8], strides = [1, 1]} : vector<16x32xf32> to vector<8x8xf32>
    %124 = vector.extract_strided_slice %15 {offsets = [8, 24], sizes = [8, 8], strides = [1, 1]} : vector<16x32xf32> to vector<8x8xf32>
    %cst_43 = arith.constant dense<0.000000e+00> : vector<8x8xf32>
    %125 = tpu.matmul %122, %123, %cst_43 {dimension_numbers = #tpu.dot_dimension_numbers<[1], [1], [0], [0], [0, 0, 1, 0], [], []>} : vector<8x8xf32>, vector<8x8xf32>, vector<8x8xf32> -> vector<8x8xf32>
    %cst_44 = arith.constant dense<0xFF800000> : vector<8xf32>
    %126 = vector.multi_reduction <maximumf>, %125, %cst_44 [1] : vector<8x8xf32> to vector<8xf32>
    %127 = vector.shape_cast %126 : vector<8xf32> to vector<8x1xf32>
    %128 = vector.broadcast %127 : vector<8x1xf32> to vector<8x8xf32>
    %129 = arith.subf %125, %128 : vector<8x8xf32>
    %130 = math.exp %129 : vector<8x8xf32>
    %cst_45 = arith.constant dense<0.000000e+00> : vector<8xf32>
    %131 = vector.multi_reduction <add>, %130, %cst_45 [1] : vector<8x8xf32> to vector<8xf32>
    %132 = vector.shape_cast %131 : vector<8xf32> to vector<8x1xf32>
    %133 = tpu.reciprocal %132 : vector<8x1xf32> -> vector<8x1xf32>
    %134 = vector.broadcast %133 : vector<8x1xf32> to vector<8x8xf32>
    %135 = arith.mulf %130, %134 : vector<8x8xf32>
    %cst_46 = arith.constant dense<0.000000e+00> : vector<8x8xf32>
    %136 = tpu.matmul %135, %124, %cst_46 {dimension_numbers = #tpu.dot_dimension_numbers<[1], [0], [0], [1], [0, 0, 1, 1], [], []>} : vector<8x8xf32>, vector<8x8xf32>, vector<8x8xf32> -> vector<8x8xf32>
    %137 = tpu.concatenate %91, %106, %121, %136 in 1 : vector<8x8xf32>, vector<8x8xf32>, vector<8x8xf32>, vector<8x8xf32> -> vector<8x32xf32>
    %138 = tpu.concatenate %76, %137 in 0 : vector<8x32xf32>, vector<8x32xf32> -> vector<16x32xf32>
    %c0_47 = arith.constant 0 : index
    %c0_48 = arith.constant 0 : index
    %139 = vector.load %arg7[%c0_47, %c0_48] : memref<32x32xf32, #tpu.memory_space<vmem>>, vector<32x32xf32>
    %cst_49 = arith.constant dense<0.000000e+00> : vector<16x32xf32>
    %140 = tpu.matmul %138, %139, %cst_49 {dimension_numbers = #tpu.dot_dimension_numbers<[1], [0], [0], [1], [0, 0, 1, 1], [], []>} : vector<16x32xf32>, vector<32x32xf32>, vector<16x32xf32> -> vector<16x32xf32>
    %c0_50 = arith.constant 0 : index
    %c0_51 = arith.constant 0 : index
    %141 = vector.load %arg8[%c0_50, %c0_51] : memref<1x32xf32, #tpu.memory_space<vmem>>, vector<1x32xf32>
    %142 = vector.broadcast %141 : vector<1x32xf32> to vector<16x32xf32>
    %143 = arith.addf %140, %142 : vector<16x32xf32>
    %c0_52 = arith.constant 0 : index
    %c0_53 = arith.constant 0 : index
    %144 = vector.load %arg9[%c0_52, %c0_53] : memref<16x32xf32, #tpu.memory_space<vmem>>, vector<16x32xf32>
    tpu.vector_store %arg9[%c0_52, %c0_53], %143 {strides = array<i32>} : memref<16x32xf32, #tpu.memory_space<vmem>>, vector<16x32xf32>,
    return
  }
}

</mosaic_0001>

<llo_original>
// kernel: attention_forward.1
$region0: #{attention_forward.1}
  #allocation0 [shape = 'u32[]', space=smem, size = 0x4, offset = 0x4, fixed_abs, tag = 'smem constant byte address 0x4 - core index']
  #allocation1 [shape = 'u32[72,128]{1,0:T(1,128)}', space=vmem, size = 0x9000, scoped, tag = 'internal scratch']
  %s0 = inlined_call_operand.vmem [shape: f32[16,32], index: 0, kind: input, shape index: {}]
  %s1 = inlined_call_operand.vmem [shape: f32[32,32], index: 1, kind: input, shape index: {}]
  %s2 = inlined_call_operand.vmem [shape: f32[1,32], index: 2, kind: input, shape index: {}]
  %s3 = inlined_call_operand.hbm [shape: f32[32,32], index: 3, kind: input, shape index: {}]
  %s4 = inlined_call_operand.vmem [shape: f32[1,32], index: 4, kind: input, shape index: {}]
  %s5 = inlined_call_operand.hbm [shape: f32[32,32], index: 5, kind: input, shape index: {}]
  %s6 = inlined_call_operand.vmem [shape: f32[1,32], index: 6, kind: input, shape index: {}]
  %s7 = inlined_call_operand.hbm [shape: f32[32,32], index: 7, kind: input, shape index: {}]
  %s8 = inlined_call_operand.vmem [shape: f32[1,32], index: 8, kind: input, shape index: {}]
  %s9 = inlined_call_operand.vmem [shape: f32[16,32], index: 9, kind: output, shape index: {}]
  %s10 = sld [smem:[#allocation0]]
  $region58: #{attention_forward.1} parent=0
    _
  %s12 = ssub.s32 1, %s10
  %s13 = scalar_select 0, %s12, %s10
  $region1: #{attention_forward.1} parent=0
    #allocation2 [shape = 'u8[16384]{0}', space=vmem, size = 0x4000, scoped, tag = 'input window, operand 3, single buffered']
    #allocation3 [shape = 's32[1]{0}', space=sflag, size = 0x4, scoped, tag = 'scoped memory for attention_forward.1']
    #allocation4 [shape = 'u8[16384]{0}', space=vmem, size = 0x4000, scoped, tag = 'input window, operand 5, single buffered']
    #allocation5 [shape = 's32[1]{0}', space=sflag, size = 0x4, scoped, tag = 'scoped memory for attention_forward.1']
    #allocation6 [shape = 'u8[16384]{0}', space=vmem, size = 0x4000, scoped, tag = 'input window, operand 7, single buffered']
    %14 = vsyncpa [#allocation3], 0
    %15 = vsyncpa [#allocation5], 0
    // Predicated region
    $region2: #{attention_forward.1} parent=1 // pred_check
      _
    $region3: #{attention_forward.1} parent=1 // pred_check_branch
      %17 = sbr.rel (0) target = $region5
    $region4: #{attention_forward.1} parent=1 // pred_region
      _
    $region5: #{attention_forward.1} parent=1 // pred_fallthru
      _
    // Predicated region
    $region6: #{attention_forward.1} parent=1 // pred_check
      _
    $region7: #{attention_forward.1} parent=1 // pred_check_branch
      %19 = sbr.rel (0) target = $region9
    $region8: #{attention_forward.1} parent=1 // pred_region
      _
    $region9: #{attention_forward.1} parent=1 // pred_fallthru
      _
    // Predicated region
    $region10: #{attention_forward.1} parent=1 // pred_check
      _
    $region11: #{attention_forward.1} parent=1 // pred_check_branch
      %21 = sbr.rel (0) target = $region13
    $region12: #{attention_forward.1} parent=1 // pred_region
      _
    $region13: #{attention_forward.1} parent=1 // pred_fallthru
      _
    // Predicated region
    $region14: #{attention_forward.1} parent=1 // pred_check
      _
    $region15: #{attention_forward.1} parent=1 // pred_check_branch
      %23 = sbr.rel (0) target = $region17
    $region16: #{attention_forward.1} parent=1 // pred_region
      %25 = vsyncadd [#allocation3], 0
      %s26 = sshll.u32 %s3, 4
      %s27 = int_to_ptr.hbm [resolvable:$true] %s26
      %s28 = sshll.u32 [#allocation2], 4
      %s29 = int_to_ptr.vmem [resolvable:$true] %s28
      %34 = dma.hbm_to_vmem [thread:$0]  %s27, 512, %s29, [#allocation3], 128, 128, 8
    $region17: #{attention_forward.1} parent=1 // pred_fallthru
      _
    // Predicated region
    $region18: #{attention_forward.1} parent=1 // pred_check
      _
    $region19: #{attention_forward.1} parent=1 // pred_check_branch
      %36 = sbr.rel (0) target = $region21
    $region20: #{attention_forward.1} parent=1 // pred_region
      _
    $region21: #{attention_forward.1} parent=1 // pred_fallthru
      _
    // Predicated region
    $region22: #{attention_forward.1} parent=1 // pred_check
      _
    $region23: #{attention_forward.1} parent=1 // pred_check_branch
      %38 = sbr.rel (0) target = $region25
    $region24: #{attention_forward.1} parent=1 // pred_region
      %40 = vsyncadd [#allocation5], 0
      %s41 = sshll.u32 %s5, 4
      %s42 = int_to_ptr.hbm [resolvable:$true] %s41
      %s43 = sshll.u32 [#allocation4], 4
      %s44 = int_to_ptr.vmem [resolvable:$true] %s43
      %49 = dma.hbm_to_vmem [thread:$0]  %s42, 512, %s44, [#allocation5], 128, 128, 8
    $region25: #{attention_forward.1} parent=1 // pred_fallthru
      _
    // Predicated region
    $region26: #{attention_forward.1} parent=1 // pred_check
      _
    $region27: #{attention_forward.1} parent=1 // pred_check_branch
      %51 = sbr.rel (0) target = $region29
    $region28: #{attention_forward.1} parent=1 // pred_region
      _
    $region29: #{attention_forward.1} parent=1 // pred_fallthru
      _
    // Predicated region
    $region30: #{attention_forward.1} parent=1 // pred_check
      _
    $region31: #{attention_forward.1} parent=1 // pred_check_branch
      %53 = sbr.rel (0) target = $region33
    $region32: #{attention_forward.1} parent=1 // pred_region
      %55 = vsyncadd [#allocation5], 0
      %s56 = sshll.u32 %s7, 4
      %s57 = int_to_ptr.hbm [resolvable:$true] %s56
      %s58 = sshll.u32 [#allocation6], 4
      %s59 = int_to_ptr.vmem [resolvable:$true] %s58
      %64 = dma.hbm_to_vmem [thread:$0]  %s57, 512, %s59, [#allocation5], 128, 128, 8
    $region33: #{attention_forward.1} parent=1 // pred_fallthru
      _
    // Predicated region
    $region34: #{attention_forward.1} parent=1 // pred_check
      _
    $region35: #{attention_forward.1} parent=1 // pred_check_branch
      %66 = sbr.rel (0) target = $region37
    $region36: #{attention_forward.1} parent=1 // pred_region
      _
    $region37: #{attention_forward.1} parent=1 // pred_fallthru
      _
    // Predicated region
    $region38: #{attention_forward.1} parent=1 // pred_check
      _
    $region39: #{attention_forward.1} parent=1 // pred_check_branch
      %68 = sbr.rel (0) target = $region41
    $region40: #{attention_forward.1} parent=1 // pred_region
      %70 = dma.done [#allocation3], 512
    $region41: #{attention_forward.1} parent=1 // pred_fallthru
      _
    // Predicated region
    $region42: #{attention_forward.1} parent=1 // pred_check
      _
    $region43: #{attention_forward.1} parent=1 // pred_check_branch
      %72 = sbr.rel (0) target = $region45
    $region44: #{attention_forward.1} parent=1 // pred_region
      %74 = dma.done [#allocation5], 512
    $region45: #{attention_forward.1} parent=1 // pred_fallthru
      _
    // Predicated region
    $region46: #{attention_forward.1} parent=1 // pred_check
      _
    $region47: #{attention_forward.1} parent=1 // pred_check_branch
      %76 = sbr.rel (0) target = $region49
    $region48: #{attention_forward.1} parent=1 // pred_region
      %78 = dma.done [#allocation5], 512
    $region49: #{attention_forward.1} parent=1 // pred_fallthru
      _
    %v79 = vld [vmem:[%s0] sm:$0xff]
    %v80 = vld [vmem:[%s0 + $0x8] sm:$0xff]
    %v81 = vld [vmem:[%s1] sm:$0xff]
    %v82 = vld [vmem:[%s1 + $0x8] sm:$0xff]
    %v83 = vld [vmem:[%s1 + $0x10] sm:$0xff]
    %v84 = vld [vmem:[%s1 + $0x18] sm:$0xff]
    %v85 = vld [vmem:[%s2] sm:$0x1]
    %v87 = vperm.slane %v85, 0
    %vm89 = vcmask 261120
    %v91 = vsel %vm89, %v79, 0
    %v94 = vsel %vm89, %v80, 0
    %96 = vmatpush.msra.mxu0 0.0
    %97 = vmatpush.msra.mxu0 0.0
    %98 = vmatpush.msra.mxu0 0.0
    %99 = vmatpush.msra.mxu0 0.0
    %100 = vmatpush.msra.mxu0 0.0
    %101 = vmatpush.msra.mxu0 0.0
    %102 = vmatpush.msra.mxu0 0.0
    %103 = vmatpush.msra.mxu0 0.0
    %104 = vmatpush.msra.mxu0 0.0
    %105 = vmatpush.msra.mxu0 0.0
    %106 = vmatpush.msra.mxu0 0.0
    %107 = vmatpush.msra.mxu0 0.0
    %108 = vmatpush.msra.mxu0 %v84
    %109 = vmatpush.msra.mxu0 %v83
    %110 = vmatpush.msra.mxu0 %v82
    %111 = vmatpush.msra.mxu0 %v81
    %112 = vmatmul.f32.gmra.mxu0 %v91
    %v113 = vpop.f32.mrf.mxu0
    %v114 = vadd.f32 %v87, %v113
    %115 = vmatmul.f32.gmra.mxu0 %v94
    %v116 = vpop.f32.mrf.mxu0
    %v117 = vadd.f32 %v87, %v116
    %118 = vdwg.mxu0
    %v119 = vld [vmem:[#allocation2] sm:$0xff]
    %v120 = vld [vmem:[#allocation2 + $0x8] sm:$0xff]
    %v121 = vld [vmem:[#allocation2 + $0x10] sm:$0xff]
    %v122 = vld [vmem:[#allocation2 + $0x18] sm:$0xff]
    %v123 = vld [vmem:[%s4] sm:$0x1]
    %v125 = vperm.slane %v123, 0
    %127 = vmatpush.msra.mxu0 0.0
    %128 = vmatpush.msra.mxu0 0.0
    %129 = vmatpush.msra.mxu0 0.0
    %130 = vmatpush.msra.mxu0 0.0
    %131 = vmatpush.msra.mxu0 0.0
    %132 = vmatpush.msra.mxu0 0.0
    %133 = vmatpush.msra.mxu0 0.0
    %134 = vmatpush.msra.mxu0 0.0
    %135 = vmatpush.msra.mxu0 0.0
    %136 = vmatpush.msra.mxu0 0.0
    %137 = vmatpush.msra.mxu0 0.0
    %138 = vmatpush.msra.mxu0 0.0
    %139 = vmatpush.msra.mxu0 %v122
    %140 = vmatpush.msra.mxu0 %v121
    %141 = vmatpush.msra.mxu0 %v120
    %142 = vmatpush.msra.mxu0 %v119
    %143 = vmatmul.f32.gmra.mxu0 %v91
    %v144 = vpop.f32.mrf.mxu0
    %v145 = vadd.f32 %v125, %v144
    %146 = vmatmul.f32.gmra.mxu0 %v94
    %v147 = vpop.f32.mrf.mxu0
    %v148 = vadd.f32 %v125, %v147
    %149 = vdwg.mxu0
    %v150 = vld [vmem:[#allocation4] sm:$0xff]
    %v151 = vld [vmem:[#allocation4 + $0x8] sm:$0xff]
    %v152 = vld [vmem:[#allocation4 + $0x10] sm:$0xff]
    %v153 = vld [vmem:[#allocation4 + $0x18] sm:$0xff]
    %v154 = vld [vmem:[%s6] sm:$0x1]
    %v156 = vperm.slane %v154, 0
    %158 = vmatpush.msra.mxu0 0.0
    %159 = vmatpush.msra.mxu0 0.0
    %160 = vmatpush.msra.mxu0 0.0
    %161 = vmatpush.msra.mxu0 0.0
    %162 = vmatpush.msra.mxu0 0.0
    %163 = vmatpush.msra.mxu0 0.0
    %164 = vmatpush.msra.mxu0 0.0
    %165 = vmatpush.msra.mxu0 0.0
    %166 = vmatpush.msra.mxu0 0.0
    %167 = vmatpush.msra.mxu0 0.0
    %168 = vmatpush.msra.mxu0 0.0
    %169 = vmatpush.msra.mxu0 0.0
    %170 = vmatpush.msra.mxu0 %v153
    %171 = vmatpush.msra.mxu0 %v152
    %172 = vmatpush.msra.mxu0 %v151
    %173 = vmatpush.msra.mxu0 %v150
    %174 = vmatmul.f32.gmra.mxu0 %v91
    %v175 = vpop.f32.mrf.mxu0
    %v176 = vadd.f32 %v156, %v175
    %177 = vmatmul.f32.gmra.mxu0 %v94
    %v178 = vpop.f32.mrf.mxu0
    %v179 = vadd.f32 %v156, %v178
    %180 = vdwg.mxu0
    %vm181 = vcmask 64512
    %v183 = vsel %vm181, %v114, 0
    %v186 = vsel %vm181, %v145, 0
    %188 = vmatpush.xpose.msra.mxu0 0.0
    %189 = vmatpush.xpose.msra.mxu0 0.0
    %190 = vmatpush.xpose.msra.mxu0 0.0
    %191 = vmatpush.xpose.msra.mxu0 0.0
    %192 = vmatpush.xpose.msra.mxu0 0.0
    %193 = vmatpush.xpose.msra.mxu0 0.0
    %194 = vmatpush.xpose.msra.mxu0 0.0
    %195 = vmatpush.xpose.msra.mxu0 0.0
    %196 = vmatpush.xpose.msra.mxu0 0.0
    %197 = vmatpush.xpose.msra.mxu0 0.0
    %198 = vmatpush.xpose.msra.mxu0 0.0
    %199 = vmatpush.xpose.msra.mxu0 0.0
    %200 = vmatpush.xpose.msra.mxu0 0.0
    %201 = vmatpush.xpose.msra.mxu0 0.0
    %202 = vmatpush.xpose.msra.mxu0 0.0
    %203 = vmatpush.xpose.msra.mxu0 %v186
    %204 = vmatmul.f32.gmra.mxu0 %v183
    %v205 = vpop.f32.mrf.mxu0
    %v206 = vadd.f32 0.0, %v205
    %207 = vdwg.mxu0
    %v208 = vsel %vm181, %v206, -inf
    %209 = vmax.xlane.f32.xlu0 %v208
    %v210 = vpop.xlane.xlu0 %209
    %v211 = vsub.f32 %v206, %v210
    %v212 = vmul.f32 %v211, 1.442695
    %v213 = vpow.pop %v212
    %v214 = vsel %vm181, %v213, 0.0
    %215 = vadd.xlane.f32.xlu0 %v214
    %v216 = vpop.xlane.xlu0 %215
    %v217 = vrcp.pop %v216
    %v218 = vmul.f32 %v216, %v217
    %v219 = vsub.f32 1.0, %v218
    %v220 = vmul.f32 %v217, %v219
    %v221 = vadd.f32 %v217, %v220
    %vm222 = vweird.f32 %v216
    %vm223 = vweird.f32 %v217
    %vm224 = vmor %vm222, %vm223
    %v225 = vsel %vm224, %v217, %v221
    %v226 = vand.u32 2147483647, %v216
    %vm227 = vcmp.eq.f32.partialorder %v226, 8.507059e+37
    %v228 = vand.u32 %v216, 2147483648
    %v229 = vor.u32 1.1754944e-38, %v228
    %v230 = vsel %vm227, %v229, %v225
    %v231 = vmul.f32 %v213, %v230
    %v233 = vsel %vm181, %v231, 0
    %235 = vmatpush.msra.mxu0 0.0
    %236 = vmatpush.msra.mxu0 0.0
    %237 = vmatpush.msra.mxu0 0.0
    %238 = vmatpush.msra.mxu0 0.0
    %239 = vmatpush.msra.mxu0 0.0
    %240 = vmatpush.msra.mxu0 0.0
    %241 = vmatpush.msra.mxu0 0.0
    %242 = vmatpush.msra.mxu0 0.0
    %243 = vmatpush.msra.mxu0 0.0
    %244 = vmatpush.msra.mxu0 0.0
    %245 = vmatpush.msra.mxu0 0.0
    %246 = vmatpush.msra.mxu0 0.0
    %247 = vmatpush.msra.mxu0 0.0
    %248 = vmatpush.msra.mxu0 0.0
    %249 = vmatpush.msra.mxu0 0.0
    %250 = vmatpush.msra.mxu0 %v176
    %251 = vmatmul.f32.gmra.mxu0 %v233
    %v252 = vpop.f32.mrf.mxu0
    %v253 = vadd.f32 0.0, %v252
    %254 = vdwg.mxu0
    %255 = vrot.lane.b32.xlu0 %v114, 120
    %v256 = vpop.permute.xlu0 %255
    %257 = vrot.lane.b32.xlu0 %v145, 120
    %v258 = vpop.permute.xlu0 %257
    %v259 = vsel %vm181, %v256, 0
    %v261 = vsel %vm181, %v258, 0
    %263 = vmatpush.xpose.msra.mxu0 0.0
    %264 = vmatpush.xpose.msra.mxu0 0.0
    %265 = vmatpush.xpose.msra.mxu0 0.0
    %266 = vmatpush.xpose.msra.mxu0 0.0
    %267 = vmatpush.xpose.msra.mxu0 0.0
    %268 = vmatpush.xpose.msra.mxu0 0.0
    %269 = vmatpush.xpose.msra.mxu0 0.0
    %270 = vmatpush.xpose.msra.mxu0 0.0
    %271 = vmatpush.xpose.msra.mxu0 0.0
    %272 = vmatpush.xpose.msra.mxu0 0.0
    %273 = vmatpush.xpose.msra.mxu0 0.0
    %274 = vmatpush.xpose.msra.mxu0 0.0
    %275 = vmatpush.xpose.msra.mxu0 0.0
    %276 = vmatpush.xpose.msra.mxu0 0.0
    %277 = vmatpush.xpose.msra.mxu0 0.0
    %278 = vmatpush.xpose.msra.mxu0 %v261
    %279 = vmatmul.f32.gmra.mxu0 %v259
    %v280 = vpop.f32.mrf.mxu0
    %v281 = vadd.f32 0.0, %v280
    %282 = vdwg.mxu0
    %v283 = vsel %vm181, %v281, -inf
    %284 = vmax.xlane.f32.xlu0 %v283
    %v285 = vpop.xlane.xlu0 %284
    %v286 = vsub.f32 %v281, %v285
    %v287 = vmul.f32 %v286, 1.442695
    %v288 = vpow.pop %v287
    %v289 = vsel %vm181, %v288, 0.0
    %290 = vadd.xlane.f32.xlu0 %v289
    %v291 = vpop.xlane.xlu0 %290
    %v292 = vrcp.pop %v291
    %v293 = vmul.f32 %v291, %v292
    %v294 = vsub.f32 1.0, %v293
    %v295 = vmul.f32 %v292, %v294
    %v296 = vadd.f32 %v292, %v295
    %vm297 = vweird.f32 %v291
    %vm298 = vweird.f32 %v292
    %vm299 = vmor %vm297, %vm298
    %v300 = vsel %vm299, %v292, %v296
    %v301 = vand.u32 2147483647, %v291
    %vm302 = vcmp.eq.f32.partialorder %v301, 8.507059e+37
    %v303 = vand.u32 %v291, 2147483648
    %v304 = vor.u32 1.1754944e-38, %v303
    %v305 = vsel %vm302, %v304, %v300
    %v306 = vmul.f32 %v288, %v305
    %308 = vrot.lane.b32.xlu0 %v176, 120
    %v309 = vpop.permute.xlu0 %308
    %v312 = vsel %vm181, %v306, 0
    %314 = vmatpush.msra.mxu0 0.0
    %315 = vmatpush.msra.mxu0 0.0
    %316 = vmatpush.msra.mxu0 0.0
    %317 = vmatpush.msra.mxu0 0.0
    %318 = vmatpush.msra.mxu0 0.0
    %319 = vmatpush.msra.mxu0 0.0
    %320 = vmatpush.msra.mxu0 0.0
    %321 = vmatpush.msra.mxu0 0.0
    %322 = vmatpush.msra.mxu0 0.0
    %323 = vmatpush.msra.mxu0 0.0
    %324 = vmatpush.msra.mxu0 0.0
    %325 = vmatpush.msra.mxu0 0.0
    %326 = vmatpush.msra.mxu0 0.0
    %327 = vmatpush.msra.mxu0 0.0
    %328 = vmatpush.msra.mxu0 0.0
    %329 = vmatpush.msra.mxu0 %v309
    %330 = vmatmul.f32.gmra.mxu0 %v312
    %v331 = vpop.f32.mrf.mxu0
    %v332 = vadd.f32 0.0, %v331
    %333 = vdwg.mxu0
    %334 = vrot.lane.b32.xlu0 %v114, 112
    %v335 = vpop.permute.xlu0 %334
    %336 = vrot.lane.b32.xlu0 %v145, 112
    %v337 = vpop.permute.xlu0 %336
    %v338 = vsel %vm181, %v335, 0
    %v340 = vsel %vm181, %v337, 0
    %342 = vmatpush.xpose.msra.mxu0 0.0
    %343 = vmatpush.xpose.msra.mxu0 0.0
    %344 = vmatpush.xpose.msra.mxu0 0.0
    %345 = vmatpush.xpose.msra.mxu0 0.0
    %346 = vmatpush.xpose.msra.mxu0 0.0
    %347 = vmatpush.xpose.msra.mxu0 0.0
    %348 = vmatpush.xpose.msra.mxu0 0.0
    %349 = vmatpush.xpose.msra.mxu0 0.0
    %350 = vmatpush.xpose.msra.mxu0 0.0
    %351 = vmatpush.xpose.msra.mxu0 0.0
    %352 = vmatpush.xpose.msra.mxu0 0.0
    %353 = vmatpush.xpose.msra.mxu0 0.0
    %354 = vmatpush.xpose.msra.mxu0 0.0
    %355 = vmatpush.xpose.msra.mxu0 0.0
    %356 = vmatpush.xpose.msra.mxu0 0.0
    %357 = vmatpush.xpose.msra.mxu0 %v340
    %358 = vmatmul.f32.gmra.mxu0 %v338
    %v359 = vpop.f32.mrf.mxu0
    %v360 = vadd.f32 0.0, %v359
    %361 = vdwg.mxu0
    %v362 = vsel %vm181, %v360, -inf
    %363 = vmax.xlane.f32.xlu0 %v362
    %v364 = vpop.xlane.xlu0 %363
    %v365 = vsub.f32 %v360, %v364
    %v366 = vmul.f32 %v365, 1.442695
    %v367 = vpow.pop %v366
    %v368 = vsel %vm181, %v367, 0.0
    %369 = vadd.xlane.f32.xlu0 %v368
    %v370 = vpop.xlane.xlu0 %369
    %v371 = vrcp.pop %v370
    %v372 = vmul.f32 %v370, %v371
    %v373 = vsub.f32 1.0, %v372
    %v374 = vmul.f32 %v371, %v373
    %v375 = vadd.f32 %v371, %v374
    %vm376 = vweird.f32 %v370
    %vm377 = vweird.f32 %v371
    %vm378 = vmor %vm376, %vm377
    %v379 = vsel %vm378, %v371, %v375
    %v380 = vand.u32 2147483647, %v370
    %vm381 = vcmp.eq.f32.partialorder %v380, 8.507059e+37
    %v382 = vand.u32 %v370, 2147483648
    %v383 = vor.u32 1.1754944e-38, %v382
    %v384 = vsel %vm381, %v383, %v379
    %v385 = vmul.f32 %v367, %v384
    %386 = vrot.lane.b32.xlu0 %v176, 112
    %v387 = vpop.permute.xlu0 %386
    %v390 = vsel %vm181, %v385, 0
    %392 = vmatpush.msra.mxu0 0.0
    %393 = vmatpush.msra.mxu0 0.0
    %394 = vmatpush.msra.mxu0 0.0
    %395 = vmatpush.msra.mxu0 0.0
    %396 = vmatpush.msra.mxu0 0.0
    %397 = vmatpush.msra.mxu0 0.0
    %398 = vmatpush.msra.mxu0 0.0
    %399 = vmatpush.msra.mxu0 0.0
    %400 = vmatpush.msra.mxu0 0.0
    %401 = vmatpush.msra.mxu0 0.0
    %402 = vmatpush.msra.mxu0 0.0
    %403 = vmatpush.msra.mxu0 0.0
    %404 = vmatpush.msra.mxu0 0.0
    %405 = vmatpush.msra.mxu0 0.0
    %406 = vmatpush.msra.mxu0 0.0
    %407 = vmatpush.msra.mxu0 %v387
    %408 = vmatmul.f32.gmra.mxu0 %v390
    %v409 = vpop.f32.mrf.mxu0
    %v410 = vadd.f32 0.0, %v409
    %411 = vdwg.mxu0
    %412 = vrot.lane.b32.xlu0 %v114, 104
    %v413 = vpop.permute.xlu0 %412
    %414 = vrot.lane.b32.xlu0 %v145, 104
    %v415 = vpop.permute.xlu0 %414
    %v416 = vsel %vm181, %v413, 0
    %v418 = vsel %vm181, %v415, 0
    %420 = vmatpush.xpose.msra.mxu0 0.0
    %421 = vmatpush.xpose.msra.mxu0 0.0
    %422 = vmatpush.xpose.msra.mxu0 0.0
    %423 = vmatpush.xpose.msra.mxu0 0.0
    %424 = vmatpush.xpose.msra.mxu0 0.0
    %425 = vmatpush.xpose.msra.mxu0 0.0
    %426 = vmatpush.xpose.msra.mxu0 0.0
    %427 = vmatpush.xpose.msra.mxu0 0.0
    %428 = vmatpush.xpose.msra.mxu0 0.0
    %429 = vmatpush.xpose.msra.mxu0 0.0
    %430 = vmatpush.xpose.msra.mxu0 0.0
    %431 = vmatpush.xpose.msra.mxu0 0.0
    %432 = vmatpush.xpose.msra.mxu0 0.0
    %433 = vmatpush.xpose.msra.mxu0 0.0
    %434 = vmatpush.xpose.msra.mxu0 0.0
    %435 = vmatpush.xpose.msra.mxu0 %v418
    %436 = vmatmul.f32.gmra.mxu0 %v416
    %v437 = vpop.f32.mrf.mxu0
    %v438 = vadd.f32 0.0, %v437
    %439 = vdwg.mxu0
    %v440 = vsel %vm181, %v438, -inf
    %441 = vmax.xlane.f32.xlu0 %v440
    %v442 = vpop.xlane.xlu0 %441
    %v443 = vsub.f32 %v438, %v442
    %v444 = vmul.f32 %v443, 1.442695
    %v445 = vpow.pop %v444
    %v446 = vsel %vm181, %v445, 0.0
    %447 = vadd.xlane.f32.xlu0 %v446
    %v448 = vpop.xlane.xlu0 %447
    %v449 = vrcp.pop %v448
    %v450 = vmul.f32 %v448, %v449
    %v451 = vsub.f32 1.0, %v450
    %v452 = vmul.f32 %v449, %v451
    %v453 = vadd.f32 %v449, %v452
    %vm454 = vweird.f32 %v448
    %vm455 = vweird.f32 %v449
    %vm456 = vmor %vm454, %vm455
    %v457 = vsel %vm456, %v449, %v453
    %v458 = vand.u32 2147483647, %v448
    %vm459 = vcmp.eq.f32.partialorder %v458, 8.507059e+37
    %v460 = vand.u32 %v448, 2147483648
    %v461 = vor.u32 1.1754944e-38, %v460
    %v462 = vsel %vm459, %v461, %v457
    %v463 = vmul.f32 %v445, %v462
    %464 = vrot.lane.b32.xlu0 %v176, 104
    %v465 = vpop.permute.xlu0 %464
    %v468 = vsel %vm181, %v463, 0
    %470 = vmatpush.msra.mxu0 0.0
    %471 = vmatpush.msra.mxu0 0.0
    %472 = vmatpush.msra.mxu0 0.0
    %473 = vmatpush.msra.mxu0 0.0
    %474 = vmatpush.msra.mxu0 0.0
    %475 = vmatpush.msra.mxu0 0.0
    %476 = vmatpush.msra.mxu0 0.0
    %477 = vmatpush.msra.mxu0 0.0
    %478 = vmatpush.msra.mxu0 0.0
    %479 = vmatpush.msra.mxu0 0.0
    %480 = vmatpush.msra.mxu0 0.0
    %481 = vmatpush.msra.mxu0 0.0
    %482 = vmatpush.msra.mxu0 0.0
    %483 = vmatpush.msra.mxu0 0.0
    %484 = vmatpush.msra.mxu0 0.0
    %485 = vmatpush.msra.mxu0 %v465
    %486 = vmatmul.f32.gmra.mxu0 %v468
    %v487 = vpop.f32.mrf.mxu0
    %v488 = vadd.f32 0.0, %v487
    %489 = vdwg.mxu0
    %491 = vrot.lane.b32.xlu0 %v332, 8
    %v492 = vpop.permute.xlu0 %491
    %495 = vrot.lane.b32.xlu0 %v410, 16
    %v496 = vpop.permute.xlu0 %495
    %499 = vrot.lane.b32.xlu0 %v488, 24
    %v500 = vpop.permute.xlu0 %499
    %v502 = vsel %vm181, %v253, %v492
    %vm503 = vcmask 130048
    %v504 = vsel %vm503, %v502, %v496
    %vm505 = vcmask 195584
    %v506 = vsel %vm505, %v504, %v500
    %v508 = vsel %vm181, %v117, 0
    %v511 = vsel %vm181, %v148, 0
    %513 = vmatpush.xpose.msra.mxu0 0.0
    %514 = vmatpush.xpose.msra.mxu0 0.0
    %515 = vmatpush.xpose.msra.mxu0 0.0
    %516 = vmatpush.xpose.msra.mxu0 0.0
    %517 = vmatpush.xpose.msra.mxu0 0.0
    %518 = vmatpush.xpose.msra.mxu0 0.0
    %519 = vmatpush.xpose.msra.mxu0 0.0
    %520 = vmatpush.xpose.msra.mxu0 0.0
    %521 = vmatpush.xpose.msra.mxu0 0.0
    %522 = vmatpush.xpose.msra.mxu0 0.0
    %523 = vmatpush.xpose.msra.mxu0 0.0
    %524 = vmatpush.xpose.msra.mxu0 0.0
    %525 = vmatpush.xpose.msra.mxu0 0.0
    %526 = vmatpush.xpose.msra.mxu0 0.0
    %527 = vmatpush.xpose.msra.mxu0 0.0
    %528 = vmatpush.xpose.msra.mxu0 %v511
    %529 = vmatmul.f32.gmra.mxu0 %v508
    %v530 = vpop.f32.mrf.mxu0
    %v531 = vadd.f32 0.0, %v530
    %532 = vdwg.mxu0
    %v533 = vsel %vm181, %v531, -inf
    %534 = vmax.xlane.f32.xlu0 %v533
    %v535 = vpop.xlane.xlu0 %534
    %v536 = vsub.f32 %v531, %v535
    %v537 = vmul.f32 %v536, 1.442695
    %v538 = vpow.pop %v537
    %v539 = vsel %vm181, %v538, 0.0
    %540 = vadd.xlane.f32.xlu0 %v539
    %v541 = vpop.xlane.xlu0 %540
    %v542 = vrcp.pop %v541
    %v543 = vmul.f32 %v541, %v542
    %v544 = vsub.f32 1.0, %v543
    %v545 = vmul.f32 %v542, %v544
    %v546 = vadd.f32 %v542, %v545
    %vm547 = vweird.f32 %v541
    %vm548 = vweird.f32 %v542
    %vm549 = vmor %vm547, %vm548
    %v550 = vsel %vm549, %v542, %v546
    %v551 = vand.u32 2147483647, %v541
    %vm552 = vcmp.eq.f32.partialorder %v551, 8.507059e+37
    %v553 = vand.u32 %v541, 2147483648
    %v554 = vor.u32 1.1754944e-38, %v553
    %v555 = vsel %vm552, %v554, %v550
    %v556 = vmul.f32 %v538, %v555
    %v558 = vsel %vm181, %v556, 0
    %560 = vmatpush.msra.mxu0 0.0
    %561 = vmatpush.msra.mxu0 0.0
    %562 = vmatpush.msra.mxu0 0.0
    %563 = vmatpush.msra.mxu0 0.0
    %564 = vmatpush.msra.mxu0 0.0
    %565 = vmatpush.msra.mxu0 0.0
    %566 = vmatpush.msra.mxu0 0.0
    %567 = vmatpush.msra.mxu0 0.0
    %568 = vmatpush.msra.mxu0 0.0
    %569 = vmatpush.msra.mxu0 0.0
    %570 = vmatpush.msra.mxu0 0.0
    %571 = vmatpush.msra.mxu0 0.0
    %572 = vmatpush.msra.mxu0 0.0
    %573 = vmatpush.msra.mxu0 0.0
    %574 = vmatpush.msra.mxu0 0.0
    %575 = vmatpush.msra.mxu0 %v179
    %576 = vmatmul.f32.gmra.mxu0 %v558
    %v577 = vpop.f32.mrf.mxu0
    %v578 = vadd.f32 0.0, %v577
    %579 = vdwg.mxu0
    %580 = vrot.lane.b32.xlu0 %v117, 120
    %v581 = vpop.permute.xlu0 %580
    %582 = vrot.lane.b32.xlu0 %v148, 120
    %v583 = vpop.permute.xlu0 %582
    %v584 = vsel %vm181, %v581, 0
    %v586 = vsel %vm181, %v583, 0
    %588 = vmatpush.xpose.msra.mxu0 0.0
    %589 = vmatpush.xpose.msra.mxu0 0.0
    %590 = vmatpush.xpose.msra.mxu0 0.0
    %591 = vmatpush.xpose.msra.mxu0 0.0
    %592 = vmatpush.xpose.msra.mxu0 0.0
    %593 = vmatpush.xpose.msra.mxu0 0.0
    %594 = vmatpush.xpose.msra.mxu0 0.0
    %595 = vmatpush.xpose.msra.mxu0 0.0
    %596 = vmatpush.xpose.msra.mxu0 0.0
    %597 = vmatpush.xpose.msra.mxu0 0.0
    %598 = vmatpush.xpose.msra.mxu0 0.0
    %599 = vmatpush.xpose.msra.mxu0 0.0
    %600 = vmatpush.xpose.msra.mxu0 0.0
    %601 = vmatpush.xpose.msra.mxu0 0.0
    %602 = vmatpush.xpose.msra.mxu0 0.0
    %603 = vmatpush.xpose.msra.mxu0 %v586
    %604 = vmatmul.f32.gmra.mxu0 %v584
    %v605 = vpop.f32.mrf.mxu0
    %v606 = vadd.f32 0.0, %v605
    %607 = vdwg.mxu0
    %v608 = vsel %vm181, %v606, -inf
    %609 = vmax.xlane.f32.xlu0 %v608
    %v610 = vpop.xlane.xlu0 %609
    %v611 = vsub.f32 %v606, %v610
    %v612 = vmul.f32 %v611, 1.442695
    %v613 = vpow.pop %v612
    %v614 = vsel %vm181, %v613, 0.0
    %615 = vadd.xlane.f32.xlu0 %v614
    %v616 = vpop.xlane.xlu0 %615
    %v617 = vrcp.pop %v616
    %v618 = vmul.f32 %v616, %v617
    %v619 = vsub.f32 1.0, %v618
    %v620 = vmul.f32 %v617, %v619
    %v621 = vadd.f32 %v617, %v620
    %vm622 = vweird.f32 %v616
    %vm623 = vweird.f32 %v617
    %vm624 = vmor %vm622, %vm623
    %v625 = vsel %vm624, %v617, %v621
    %v626 = vand.u32 2147483647, %v616
    %vm627 = vcmp.eq.f32.partialorder %v626, 8.507059e+37
    %v628 = vand.u32 %v616, 2147483648
    %v629 = vor.u32 1.1754944e-38, %v628
    %v630 = vsel %vm627, %v629, %v625
    %v631 = vmul.f32 %v613, %v630
    %633 = vrot.lane.b32.xlu0 %v179, 120
    %v634 = vpop.permute.xlu0 %633
    %v637 = vsel %vm181, %v631, 0
    %639 = vmatpush.msra.mxu0 0.0
    %640 = vmatpush.msra.mxu0 0.0
    %641 = vmatpush.msra.mxu0 0.0
    %642 = vmatpush.msra.mxu0 0.0
    %643 = vmatpush.msra.mxu0 0.0
    %644 = vmatpush.msra.mxu0 0.0
    %645 = vmatpush.msra.mxu0 0.0
    %646 = vmatpush.msra.mxu0 0.0
    %647 = vmatpush.msra.mxu0 0.0
    %648 = vmatpush.msra.mxu0 0.0
    %649 = vmatpush.msra.mxu0 0.0
    %650 = vmatpush.msra.mxu0 0.0
    %651 = vmatpush.msra.mxu0 0.0
    %652 = vmatpush.msra.mxu0 0.0
    %653 = vmatpush.msra.mxu0 0.0
    %654 = vmatpush.msra.mxu0 %v634
    %655 = vmatmul.f32.gmra.mxu0 %v637
    %v656 = vpop.f32.mrf.mxu0
    %v657 = vadd.f32 0.0, %v656
    %658 = vdwg.mxu0
    %659 = vrot.lane.b32.xlu0 %v117, 112
    %v660 = vpop.permute.xlu0 %659
    %661 = vrot.lane.b32.xlu0 %v148, 112
    %v662 = vpop.permute.xlu0 %661
    %v663 = vsel %vm181, %v660, 0
    %v665 = vsel %vm181, %v662, 0
    %667 = vmatpush.xpose.msra.mxu0 0.0
    %668 = vmatpush.xpose.msra.mxu0 0.0
    %669 = vmatpush.xpose.msra.mxu0 0.0
    %670 = vmatpush.xpose.msra.mxu0 0.0
    %671 = vmatpush.xpose.msra.mxu0 0.0
    %672 = vmatpush.xpose.msra.mxu0 0.0
    %673 = vmatpush.xpose.msra.mxu0 0.0
    %674 = vmatpush.xpose.msra.mxu0 0.0
    %675 = vmatpush.xpose.msra.mxu0 0.0
    %676 = vmatpush.xpose.msra.mxu0 0.0
    %677 = vmatpush.xpose.msra.mxu0 0.0
    %678 = vmatpush.xpose.msra.mxu0 0.0
    %679 = vmatpush.xpose.msra.mxu0 0.0
    %680 = vmatpush.xpose.msra.mxu0 0.0
    %681 = vmatpush.xpose.msra.mxu0 0.0
    %682 = vmatpush.xpose.msra.mxu0 %v665
    %683 = vmatmul.f32.gmra.mxu0 %v663
    %v684 = vpop.f32.mrf.mxu0
    %v685 = vadd.f32 0.0, %v684
    %686 = vdwg.mxu0
    %v687 = vsel %vm181, %v685, -inf
    %688 = vmax.xlane.f32.xlu0 %v687
    %v689 = vpop.xlane.xlu0 %688
    %v690 = vsub.f32 %v685, %v689
    %v691 = vmul.f32 %v690, 1.442695
    %v692 = vpow.pop %v691
    %v693 = vsel %vm181, %v692, 0.0
    %694 = vadd.xlane.f32.xlu0 %v693
    %v695 = vpop.xlane.xlu0 %694
    %v696 = vrcp.pop %v695
    %v697 = vmul.f32 %v695, %v696
    %v698 = vsub.f32 1.0, %v697
    %v699 = vmul.f32 %v696, %v698
    %v700 = vadd.f32 %v696, %v699
    %vm701 = vweird.f32 %v695
    %vm702 = vweird.f32 %v696
    %vm703 = vmor %vm701, %vm702
    %v704 = vsel %vm703, %v696, %v700
    %v705 = vand.u32 2147483647, %v695
    %vm706 = vcmp.eq.f32.partialorder %v705, 8.507059e+37
    %v707 = vand.u32 %v695, 2147483648
    %v708 = vor.u32 1.1754944e-38, %v707
    %v709 = vsel %vm706, %v708, %v704
    %v710 = vmul.f32 %v692, %v709
    %711 = vrot.lane.b32.xlu0 %v179, 112
    %v712 = vpop.permute.xlu0 %711
    %v715 = vsel %vm181, %v710, 0
    %717 = vmatpush.msra.mxu0 0.0
    %718 = vmatpush.msra.mxu0 0.0
    %719 = vmatpush.msra.mxu0 0.0
    %720 = vmatpush.msra.mxu0 0.0
    %721 = vmatpush.msra.mxu0 0.0
    %722 = vmatpush.msra.mxu0 0.0
    %723 = vmatpush.msra.mxu0 0.0
    %724 = vmatpush.msra.mxu0 0.0
    %725 = vmatpush.msra.mxu0 0.0
    %726 = vmatpush.msra.mxu0 0.0
    %727 = vmatpush.msra.mxu0 0.0
    %728 = vmatpush.msra.mxu0 0.0
    %729 = vmatpush.msra.mxu0 0.0
    %730 = vmatpush.msra.mxu0 0.0
    %731 = vmatpush.msra.mxu0 0.0
    %732 = vmatpush.msra.mxu0 %v712
    %733 = vmatmul.f32.gmra.mxu0 %v715
    %v734 = vpop.f32.mrf.mxu0
    %v735 = vadd.f32 0.0, %v734
    %736 = vdwg.mxu0
    %737 = vrot.lane.b32.xlu0 %v117, 104
    %v738 = vpop.permute.xlu0 %737
    %739 = vrot.lane.b32.xlu0 %v148, 104
    %v740 = vpop.permute.xlu0 %739
    %v741 = vsel %vm181, %v738, 0
    %v743 = vsel %vm181, %v740, 0
    %745 = vmatpush.xpose.msra.mxu0 0.0
    %746 = vmatpush.xpose.msra.mxu0 0.0
    %747 = vmatpush.xpose.msra.mxu0 0.0
    %748 = vmatpush.xpose.msra.mxu0 0.0
    %749 = vmatpush.xpose.msra.mxu0 0.0
    %750 = vmatpush.xpose.msra.mxu0 0.0
    %751 = vmatpush.xpose.msra.mxu0 0.0
    %752 = vmatpush.xpose.msra.mxu0 0.0
    %753 = vmatpush.xpose.msra.mxu0 0.0
    %754 = vmatpush.xpose.msra.mxu0 0.0
    %755 = vmatpush.xpose.msra.mxu0 0.0
    %756 = vmatpush.xpose.msra.mxu0 0.0
    %757 = vmatpush.xpose.msra.mxu0 0.0
    %758 = vmatpush.xpose.msra.mxu0 0.0
    %759 = vmatpush.xpose.msra.mxu0 0.0
    %760 = vmatpush.xpose.msra.mxu0 %v743
    %761 = vmatmul.f32.gmra.mxu0 %v741
    %v762 = vpop.f32.mrf.mxu0
    %v763 = vadd.f32 0.0, %v762
    %764 = vdwg.mxu0
    %v765 = vsel %vm181, %v763, -inf
    %766 = vmax.xlane.f32.xlu0 %v765
    %v767 = vpop.xlane.xlu0 %766
    %v768 = vsub.f32 %v763, %v767
    %v769 = vmul.f32 %v768, 1.442695
    %v770 = vpow.pop %v769
    %v771 = vsel %vm181, %v770, 0.0
    %772 = vadd.xlane.f32.xlu0 %v771
    %v773 = vpop.xlane.xlu0 %772
    %v774 = vrcp.pop %v773
    %v775 = vmul.f32 %v773, %v774
    %v776 = vsub.f32 1.0, %v775
    %v777 = vmul.f32 %v774, %v776
    %v778 = vadd.f32 %v774, %v777
    %vm779 = vweird.f32 %v773
    %vm780 = vweird.f32 %v774
    %vm781 = vmor %vm779, %vm780
    %v782 = vsel %vm781, %v774, %v778
    %v783 = vand.u32 2147483647, %v773
    %vm784 = vcmp.eq.f32.partialorder %v783, 8.507059e+37
    %v785 = vand.u32 %v773, 2147483648
    %v786 = vor.u32 1.1754944e-38, %v785
    %v787 = vsel %vm784, %v786, %v782
    %v788 = vmul.f32 %v770, %v787
    %789 = vrot.lane.b32.xlu0 %v179, 104
    %v790 = vpop.permute.xlu0 %789
    %v793 = vsel %vm181, %v788, 0
    %795 = vmatpush.msra.mxu0 0.0
    %796 = vmatpush.msra.mxu0 0.0
    %797 = vmatpush.msra.mxu0 0.0
    %798 = vmatpush.msra.mxu0 0.0
    %799 = vmatpush.msra.mxu0 0.0
    %800 = vmatpush.msra.mxu0 0.0
    %801 = vmatpush.msra.mxu0 0.0
    %802 = vmatpush.msra.mxu0 0.0
    %803 = vmatpush.msra.mxu0 0.0
    %804 = vmatpush.msra.mxu0 0.0
    %805 = vmatpush.msra.mxu0 0.0
    %806 = vmatpush.msra.mxu0 0.0
    %807 = vmatpush.msra.mxu0 0.0
    %808 = vmatpush.msra.mxu0 0.0
    %809 = vmatpush.msra.mxu0 0.0
    %810 = vmatpush.msra.mxu0 %v790
    %811 = vmatmul.f32.gmra.mxu0 %v793
    %v812 = vpop.f32.mrf.mxu0
    %v813 = vadd.f32 0.0, %v812
    %814 = vdwg.mxu0
    %816 = vrot.lane.b32.xlu0 %v657, 8
    %v817 = vpop.permute.xlu0 %816
    %820 = vrot.lane.b32.xlu0 %v735, 16
    %v821 = vpop.permute.xlu0 %820
    %824 = vrot.lane.b32.xlu0 %v813, 24
    %v825 = vpop.permute.xlu0 %824
    %v827 = vsel %vm181, %v578, %v817
    %v828 = vsel %vm503, %v827, %v821
    %v829 = vsel %vm505, %v828, %v825
    %v830 = vld [vmem:[#allocation6] sm:$0xff]
    %v831 = vld [vmem:[#allocation6 + $0x8] sm:$0xff]
    %v832 = vld [vmem:[#allocation6 + $0x10] sm:$0xff]
    %v833 = vld [vmem:[#allocation6 + $0x18] sm:$0xff]
    %v834 = vld [vmem:[%s8] sm:$0x1]
    %v836 = vperm.slane %v834, 0
    %v839 = vsel %vm89, %v506, 0
    %v842 = vsel %vm89, %v829, 0
    %844 = vmatpush.msra.mxu0 0.0
    %845 = vmatpush.msra.mxu0 0.0
    %846 = vmatpush.msra.mxu0 0.0
    %847 = vmatpush.msra.mxu0 0.0
    %848 = vmatpush.msra.mxu0 0.0
    %849 = vmatpush.msra.mxu0 0.0
    %850 = vmatpush.msra.mxu0 0.0
    %851 = vmatpush.msra.mxu0 0.0
    %852 = vmatpush.msra.mxu0 0.0
    %853 = vmatpush.msra.mxu0 0.0
    %854 = vmatpush.msra.mxu0 0.0
    %855 = vmatpush.msra.mxu0 0.0
    %856 = vmatpush.msra.mxu0 %v833
    %857 = vmatpush.msra.mxu0 %v832
    %858 = vmatpush.msra.mxu0 %v831
    %859 = vmatpush.msra.mxu0 %v830
    %860 = vmatmul.f32.gmra.mxu0 %v839
    %v861 = vpop.f32.mrf.mxu0
    %v862 = vadd.f32 %v836, %v861
    %863 = vmatmul.f32.gmra.mxu0 %v842
    %v864 = vpop.f32.mrf.mxu0
    %v865 = vadd.f32 %v836, %v864
    %866 = vdwg.mxu0
    %867 = vst.msk [vmem:[%s9] sm:$0xff] %vm89, %v862
    %868 = vst.msk [vmem:[%s9 + $0x8] sm:$0xff] %vm89, %v865
    // Predicated region
    $region50: #{attention_forward.1} parent=1 // pred_check
      _
    $region51: #{attention_forward.1} parent=1 // pred_check_branch
      %870 = sbr.rel (0) target = $region53
    $region52: #{attention_forward.1} parent=1 // pred_region
      _
    $region53: #{attention_forward.1} parent=1 // pred_fallthru
      _
    // Predicated region
    $region54: #{attention_forward.1} parent=1 // pred_check
      _
    $region55: #{attention_forward.1} parent=1 // pred_check_branch
      %872 = sbr.rel (0) target = $region57
    $region56: #{attention_forward.1} parent=1 // pred_region
      _
    $region57: #{attention_forward.1} parent=1 // pred_fallthru
      _
    %873 = vsyncpa [#allocation3], 1
    %874 = vsyncpa [#allocation5], 1

</llo_original>
